<compile_context>
chip_gen: v7x
topology: tpu7x:2x2x1
jax: 0.10.0
libtpu: 0.0.40
codegen_flags: <defaults>
</compile_context>

<pallas_src>
import math

import jax
import jax.numpy as jnp
from jax import lax
from jax.experimental import pallas as pl
from jax.experimental.pallas import tpu as pltpu


_LAYER_DIMS = [(8, 8), (8, 10), (10, 15), (15, 10), (10, 1)]   # (in, out) per layer


def _round_up(x, m):
    return (x + m - 1) // m * m


def _init_linear(key, fan_in, fan_out):
    """Deterministic PyTorch-style init: U(-1/sqrt(fan_in), 1/sqrt(fan_in))."""
    kw, kb = jax.random.split(key)
    bound = 1.0 / math.sqrt(fan_in)
    w = jax.random.uniform(kw, (fan_in, fan_out), jnp.float32, -bound, bound)
    b = jax.random.uniform(kb, (1, fan_out), jnp.float32, -bound, bound)
    return w, b


def fc_net_kernel(x_ref,
                  w1_ref, b1_ref,
                  w2_ref, b2_ref,
                  w3_ref, b3_ref,
                  w4_ref, b4_ref,
                  w5_ref, b5_ref,
                  o_ref):
    # x_ref is (tb, 8) in natural batch-major layout. Contract the feature axis
    # (dim 1 of w1 with dim 1 of x) so the activation is produced as
    # (features, batch) = (8, tb): batch on lanes -> all later elementwise ops,
    # matmuls, and the output store are lane-dense.
    h = lax.dot_general(
        w1_ref[...], x_ref[...],
        dimension_numbers=(((1,), (1,)), ((), ())),
        preferred_element_type=jnp.float32) + b1_ref[...]
    h = jnp.maximum(h, 0.0)                                               # (8,  tb)

    h = jnp.dot(w2_ref[...], h, preferred_element_type=jnp.float32) + b2_ref[...]
    h = jnp.maximum(h, 0.0)                                               # (16, tb)

    h = jnp.dot(w3_ref[...], h, preferred_element_type=jnp.float32) + b3_ref[...]
    h = jnp.maximum(h, 0.0)                                               # (16, tb)

    h = jnp.dot(w4_ref[...], h, preferred_element_type=jnp.float32) + b4_ref[...]
    h = jnp.maximum(h, 0.0)                                               # (16, tb)

    z = jnp.dot(w5_ref[...], h, preferred_element_type=jnp.float32) + b5_ref[...]
    z0 = z[0:1, :]                                                        # (1,  tb)
    # Exact sigmoid, only on the single real output row (exp goes to the EUP slot;
    # the cost is now 1/8 of the old full-slab version).
    o_ref[...] = 1.0 / (1.0 + jnp.exp(-z0))


def _prepare_params(params):
    """Transpose weights to (out, in) and zero-pad feature dims to multiples of 8."""
    prepped = []
    for (w, b), (din, dout) in zip(params, _LAYER_DIMS):
        din_p, dout_p = _round_up(din, 8), _round_up(dout, 8)
        wt = jnp.zeros((dout_p, din_p), jnp.float32).at[:dout, :din].set(w.T)
        bt = jnp.zeros((dout_p, 1), jnp.float32).at[:dout, 0].set(b.reshape(-1))
        prepped.append((wt, bt))
    return prepped


def fc_neural_net(x, params, *, batch_tile=None):
    """Forward pass of FCNeuralNet. x: (B, 8) float32 -> (B, 1) float32."""
    B, in_dim = x.shape
    assert in_dim == 8

    # Pad the batch only to a lane multiple (128); padding waste is bounded by tb.
    B_pad = _round_up(B, 128)

    if batch_tile is None:
        # Aim for ~8 grid steps on large batches (megacore sharding on v7x +
        # input pipelining), keep each tile >= 2048 lanes when possible (MXU push
        # cadence across the 5 dependent tiny matmuls) and <= 4096 (the (tb, 8)
        # f32 input block lane-pads to (tb, 128) in VMEM).
        target = _round_up(pl.cdiv(B_pad, 8), 128)
        tb = min(max(target, 2048), 4096)
        tb = min(tb, B_pad)
    else:
        tb = batch_tile
    assert tb % 128 == 0, "batch_tile must be a multiple of 128 (lane axis)"
    grid_steps = pl.cdiv(B_pad, tb)

    # Natural layout: no transpose, and no copy at all if B is already 128-aligned.
    x_in = x if B == B_pad else jnp.pad(x, ((0, B_pad - B), (0, 0)))

    prepped = _prepare_params(params)
    flat_params = [a for wb in prepped for a in wb]

    def full_spec(arr):
        # Tiny weights/biases: one full-array block, resident across the grid.
        return pl.BlockSpec(arr.shape, lambda i: (0, 0))

    # Deeper input pipelining only when there is actually something to overlap.
    x_spec = pl.BlockSpec((tb, 8), lambda i: (i, 0))
    if grid_steps > 1 and tb <= 8192:
        try:
            x_spec = pl.BlockSpec((tb, 8), lambda i: (i, 0),
                                  pipeline_mode=pl.Buffered(3))
        except TypeError:  # older jax without pipeline_mode kwarg
            x_spec = pl.BlockSpec((tb, 8), lambda i: (i, 0))

    grid_spec = pltpu.PrefetchScalarGridSpec(
        num_scalar_prefetch=0,
        grid=(grid_steps,),
        in_specs=[x_spec] + [full_spec(a) for a in flat_params],
        out_specs=pl.BlockSpec((1, tb), lambda i: (0, i)),
    )

    param_bytes = sum(int(a.size) * 4 for a in flat_params)
    cost = pl.CostEstimate(
        flops=1664 * B_pad,                       # padded matmul shapes per sample
        transcendentals=2 * B_pad,                # exp + reciprocal on the real row
        bytes_accessed=36 * B_pad + param_bytes,  # x in (32 B) + out (4 B) per sample
    )

    out = pl.pallas_call(
        fc_net_kernel,
        out_shape=jax.ShapeDtypeStruct((1, B_pad), jnp.float32),
        grid_spec=grid_spec,
        compiler_params=pltpu.CompilerParams(
            dimension_semantics=("parallel",),
            vmem_limit_bytes=32 * 1024 * 1024,
        ),
        cost_estimate=cost,
    )(x_in, *flat_params)

    # Drop batch padding, restore (B, 1).
    return out[0, :B].reshape(B, 1)


def reference_forward(x, params):
    h = x
    for i, (w, b) in enumerate(params):
        h = h @ w + b
        if i < len(params) - 1:
            h = jnp.maximum(h, 0.0)
        else:
            h = jax.nn.sigmoid(h)
    return h


if __name__ == "__main__":
    key = jax.random.PRNGKey(0)
    k_x, k_x2, k1, k2, k3, k4, k5 = jax.random.split(key, 7)

    # Deterministic parameters matching the module's layer shapes (stored (in, out),
    # so reference computes x @ W + b == PyTorch's x @ weight.T + bias).
    params = [
        _init_linear(k1, 8, 8),
        _init_linear(k2, 8, 10),
        _init_linear(k3, 10, 15),
        _init_linear(k4, 15, 10),
        _init_linear(k5, 10, 1),
    ]

    # Small primary case (single grid step).
    B = 32
    x = jax.random.normal(k_x, (B, 8), dtype=jnp.float32)
    out = jax.block_until_ready(fc_neural_net(x, params))
    ref = reference_forward(x, params)
    assert out.shape == (B, 1)
    assert jnp.allclose(out, ref, atol=1e-4, rtol=1e-4), \
        float(jnp.max(jnp.abs(out - ref)))

    # Multi-step grid case (exercises the pipelined path and batch padding).
    B2 = 300
    x2 = jax.random.normal(k_x2, (B2, 8), dtype=jnp.float32)
    out2 = jax.block_until_ready(fc_neural_net(x2, params, batch_tile=128))
    ref2 = reference_forward(x2, params)
    assert out2.shape == (B2, 1)
    assert jnp.allclose(out2, ref2, atol=1e-4, rtol=1e-4), \
        float(jnp.max(jnp.abs(out2 - ref2)))

    print("KERNEL_OK")
</pallas_src>

<mosaic_0001>
module attributes {stable_mosaic.version = 11 : i64} {
  func.func @fc_net_kernel(%arg0: i32, %arg1: memref<128x8xf32, #tpu.memory_space<vmem>>, %arg2: memref<8x8xf32, #tpu.memory_space<vmem>>, %arg3: memref<8x1xf32, #tpu.memory_space<vmem>>, %arg4: memref<16x8xf32, #tpu.memory_space<vmem>>, %arg5: memref<16x1xf32, #tpu.memory_space<vmem>>, %arg6: memref<16x16xf32, #tpu.memory_space<vmem>>, %arg7: memref<16x1xf32, #tpu.memory_space<vmem>>, %arg8: memref<16x16xf32, #tpu.memory_space<vmem>>, %arg9: memref<16x1xf32, #tpu.memory_space<vmem>>, %arg10: memref<8x16xf32, #tpu.memory_space<vmem>>, %arg11: memref<8x1xf32, #tpu.memory_space<vmem>>, %arg12: memref<1x128xf32, #tpu.memory_space<vmem>>) attributes {dimension_semantics = [#tpu.dimension_semantics<parallel>], iteration_bounds = array<i64: 1>, scalar_prefetch = 0 : i64, scratch_operands = 0 : i64, tpu.core_type = #tpu.core_type<tc>, window_params = [{transform_indices = @transform_0, window_bounds = array<i64: 128, 8>}, {pipeline_mode = #tpu.pipeline_mode<synchronous>, transform_indices = @transform_1, window_bounds = array<i64: 8, 8>}, {pipeline_mode = #tpu.pipeline_mode<synchronous>, transform_indices = @transform_2, window_bounds = array<i64: 8, 1>}, {pipeline_mode = #tpu.pipeline_mode<synchronous>, transform_indices = @transform_3, window_bounds = array<i64: 16, 8>}, {pipeline_mode = #tpu.pipeline_mode<synchronous>, transform_indices = @transform_4, window_bounds = array<i64: 16, 1>}, {pipeline_mode = #tpu.pipeline_mode<synchronous>, transform_indices = @transform_5, window_bounds = array<i64: 16, 16>}, {pipeline_mode = #tpu.pipeline_mode<synchronous>, transform_indices = @transform_6, window_bounds = array<i64: 16, 1>}, {pipeline_mode = #tpu.pipeline_mode<synchronous>, transform_indices = @transform_7, window_bounds = array<i64: 16, 16>}, {pipeline_mode = #tpu.pipeline_mode<synchronous>, transform_indices = @transform_8, window_bounds = array<i64: 16, 1>}, {pipeline_mode = #tpu.pipeline_mode<synchronous>, transform_indices = @transform_9, window_bounds = array<i64: 8, 16>}, {pipeline_mode = #tpu.pipeline_mode<synchronous>, transform_indices = @transform_10, window_bounds = array<i64: 8, 1>}, {transform_indices = @transform_11, window_bounds = array<i64: 1, 128>}]} {
    %c0 = arith.constant 0 : index
    %c0_0 = arith.constant 0 : index
    %0 = vector.load %arg2[%c0, %c0_0] : memref<8x8xf32, #tpu.memory_space<vmem>>, vector<8x8xf32>
    %c0_1 = arith.constant 0 : index
    %c0_2 = arith.constant 0 : index
    %1 = vector.load %arg1[%c0_1, %c0_2] : memref<128x8xf32, #tpu.memory_space<vmem>>, vector<128x8xf32>
    %cst = arith.constant dense<0.000000e+00> : vector<8x128xf32>
    %2 = tpu.matmul %0, %1, %cst {dimension_numbers = #tpu.dot_dimension_numbers<[1], [1], [0], [0], [0, 0, 1, 0], [], []>} : vector<8x8xf32>, vector<128x8xf32>, vector<8x128xf32> -> vector<8x128xf32>
    %c0_3 = arith.constant 0 : index
    %c0_4 = arith.constant 0 : index
    %3 = vector.load %arg3[%c0_3, %c0_4] : memref<8x1xf32, #tpu.memory_space<vmem>>, vector<8x1xf32>
    %4 = vector.broadcast %3 : vector<8x1xf32> to vector<8x128xf32>
    %5 = arith.addf %2, %4 : vector<8x128xf32>
    %cst_5 = arith.constant 0.000000e+00 : f32
    %6 = vector.broadcast %cst_5 : f32 to vector<8x128xf32>
    %7 = arith.maximumf %5, %6 : vector<8x128xf32>
    %c0_6 = arith.constant 0 : index
    %c0_7 = arith.constant 0 : index
    %8 = vector.load %arg4[%c0_6, %c0_7] : memref<16x8xf32, #tpu.memory_space<vmem>>, vector<16x8xf32>
    %cst_8 = arith.constant dense<0.000000e+00> : vector<16x128xf32>
    %9 = tpu.matmul %8, %7, %cst_8 {dimension_numbers = #tpu.dot_dimension_numbers<[1], [0], [0], [1], [0, 0, 1, 1], [], []>} : vector<16x8xf32>, vector<8x128xf32>, vector<16x128xf32> -> vector<16x128xf32>
    %c0_9 = arith.constant 0 : index
    %c0_10 = arith.constant 0 : index
    %10 = vector.load %arg5[%c0_9, %c0_10] : memref<16x1xf32, #tpu.memory_space<vmem>>, vector<16x1xf32>
    %11 = vector.broadcast %10 : vector<16x1xf32> to vector<16x128xf32>
    %12 = arith.addf %9, %11 : vector<16x128xf32>
    %cst_11 = arith.constant 0.000000e+00 : f32
    %13 = vector.broadcast %cst_11 : f32 to vector<16x128xf32>
    %14 = arith.maximumf %12, %13 : vector<16x128xf32>
    %c0_12 = arith.constant 0 : index
    %c0_13 = arith.constant 0 : index
    %15 = vector.load %arg6[%c0_12, %c0_13] : memref<16x16xf32, #tpu.memory_space<vmem>>, vector<16x16xf32>
    %cst_14 = arith.constant dense<0.000000e+00> : vector<16x128xf32>
    %16 = tpu.matmul %15, %14, %cst_14 {dimension_numbers = #tpu.dot_dimension_numbers<[1], [0], [0], [1], [0, 0, 1, 1], [], []>} : vector<16x16xf32>, vector<16x128xf32>, vector<16x128xf32> -> vector<16x128xf32>
    %c0_15 = arith.constant 0 : index
    %c0_16 = arith.constant 0 : index
    %17 = vector.load %arg7[%c0_15, %c0_16] : memref<16x1xf32, #tpu.memory_space<vmem>>, vector<16x1xf32>
    %18 = vector.broadcast %17 : vector<16x1xf32> to vector<16x128xf32>
    %19 = arith.addf %16, %18 : vector<16x128xf32>
    %cst_17 = arith.constant 0.000000e+00 : f32
    %20 = vector.broadcast %cst_17 : f32 to vector<16x128xf32>
    %21 = arith.maximumf %19, %20 : vector<16x128xf32>
    %c0_18 = arith.constant 0 : index
    %c0_19 = arith.constant 0 : index
    %22 = vector.load %arg8[%c0_18, %c0_19] : memref<16x16xf32, #tpu.memory_space<vmem>>, vector<16x16xf32>
    %cst_20 = arith.constant dense<0.000000e+00> : vector<16x128xf32>
    %23 = tpu.matmul %22, %21, %cst_20 {dimension_numbers = #tpu.dot_dimension_numbers<[1], [0], [0], [1], [0, 0, 1, 1], [], []>} : vector<16x16xf32>, vector<16x128xf32>, vector<16x128xf32> -> vector<16x128xf32>
    %c0_21 = arith.constant 0 : index
    %c0_22 = arith.constant 0 : index
    %24 = vector.load %arg9[%c0_21, %c0_22] : memref<16x1xf32, #tpu.memory_space<vmem>>, vector<16x1xf32>
    %25 = vector.broadcast %24 : vector<16x1xf32> to vector<16x128xf32>
    %26 = arith.addf %23, %25 : vector<16x128xf32>
    %cst_23 = arith.constant 0.000000e+00 : f32
    %27 = vector.broadcast %cst_23 : f32 to vector<16x128xf32>
    %28 = arith.maximumf %26, %27 : vector<16x128xf32>
    %c0_24 = arith.constant 0 : index
    %c0_25 = arith.constant 0 : index
    %29 = vector.load %arg10[%c0_24, %c0_25] : memref<8x16xf32, #tpu.memory_space<vmem>>, vector<8x16xf32>
    %cst_26 = arith.constant dense<0.000000e+00> : vector<8x128xf32>
    %30 = tpu.matmul %29, %28, %cst_26 {dimension_numbers = #tpu.dot_dimension_numbers<[1], [0], [0], [1], [0, 0, 1, 1], [], []>} : vector<8x16xf32>, vector<16x128xf32>, vector<8x128xf32> -> vector<8x128xf32>
    %c0_27 = arith.constant 0 : index
    %c0_28 = arith.constant 0 : index
    %31 = vector.load %arg11[%c0_27, %c0_28] : memref<8x1xf32, #tpu.memory_space<vmem>>, vector<8x1xf32>
    %32 = vector.broadcast %31 : vector<8x1xf32> to vector<8x128xf32>
    %33 = arith.addf %30, %32 : vector<8x128xf32>
    %34 = vector.extract_strided_slice %33 {offsets = [0, 0], sizes = [1, 128], strides = [1, 1]} : vector<8x128xf32> to vector<1x128xf32>
    %cst_29 = arith.constant 0.000000e+00 : f32
    %35 = vector.broadcast %cst_29 : f32 to vector<1x128xf32>
    %36 = arith.subf %35, %34 : vector<1x128xf32>
    %37 = math.exp %36 : vector<1x128xf32>
    %cst_30 = arith.constant 1.000000e+00 : f32
    %38 = vector.broadcast %cst_30 : f32 to vector<1x128xf32>
    %39 = arith.addf %38, %37 : vector<1x128xf32>
    %cst_31 = arith.constant 1.000000e+00 : f32
    %40 = vector.broadcast %cst_31 : f32 to vector<1x128xf32>
    %41 = arith.divf %40, %39 : vector<1x128xf32>
    %c0_32 = arith.constant 0 : index
    %c0_33 = arith.constant 0 : index
    %42 = vector.load %arg12[%c0_32, %c0_33] : memref<1x128xf32, #tpu.memory_space<vmem>>, vector<1x128xf32>
    tpu.vector_store %arg12[%c0_32, %c0_33], %41 {strides = array<i32>} : memref<1x128xf32, #tpu.memory_space<vmem>>, vector<1x128xf32>,
    return
  }
  func.func @transform_0(%arg0: i32) -> (i32, i32) {
    %c0_i32 = arith.constant 0 : i32
    %c0_i32_0 = arith.constant 0 : i32
    return %arg0, %c0_i32 : i32, i32
  }
  func.func @transform_1(%arg0: i32) -> (i32, i32) {
    %c0_i32 = arith.constant 0 : i32
    %c0_i32_0 = arith.constant 0 : i32
    %c0_i32_1 = arith.constant 0 : i32
    return %c0_i32, %c0_i32_0 : i32, i32
  }
  func.func @transform_2(%arg0: i32) -> (i32, i32) {
    %c0_i32 = arith.constant 0 : i32
    %c0_i32_0 = arith.constant 0 : i32
    %c0_i32_1 = arith.constant 0 : i32
    return %c0_i32, %c0_i32_0 : i32, i32
  }
  func.func @transform_3(%arg0: i32) -> (i32, i32) {
    %c0_i32 = arith.constant 0 : i32
    %c0_i32_0 = arith.constant 0 : i32
    %c0_i32_1 = arith.constant 0 : i32
    return %c0_i32, %c0_i32_0 : i32, i32
  }
  func.func @transform_4(%arg0: i32) -> (i32, i32) {
    %c0_i32 = arith.constant 0 : i32
    %c0_i32_0 = arith.constant 0 : i32
    %c0_i32_1 = arith.constant 0 : i32
    return %c0_i32, %c0_i32_0 : i32, i32
  }
  func.func @transform_5(%arg0: i32) -> (i32, i32) {
    %c0_i32 = arith.constant 0 : i32
    %c0_i32_0 = arith.constant 0 : i32
    %c0_i32_1 = arith.constant 0 : i32
    return %c0_i32, %c0_i32_0 : i32, i32
  }
  func.func @transform_6(%arg0: i32) -> (i32, i32) {
    %c0_i32 = arith.constant 0 : i32
    %c0_i32_0 = arith.constant 0 : i32
    %c0_i32_1 = arith.constant 0 : i32
    return %c0_i32, %c0_i32_0 : i32, i32
  }
  func.func @transform_7(%arg0: i32) -> (i32, i32) {
    %c0_i32 = arith.constant 0 : i32
    %c0_i32_0 = arith.constant 0 : i32
    %c0_i32_1 = arith.constant 0 : i32
    return %c0_i32, %c0_i32_0 : i32, i32
  }
  func.func @transform_8(%arg0: i32) -> (i32, i32) {
    %c0_i32 = arith.constant 0 : i32
    %c0_i32_0 = arith.constant 0 : i32
    %c0_i32_1 = arith.constant 0 : i32
    return %c0_i32, %c0_i32_0 : i32, i32
  }
  func.func @transform_9(%arg0: i32) -> (i32, i32) {
    %c0_i32 = arith.constant 0 : i32
    %c0_i32_0 = arith.constant 0 : i32
    %c0_i32_1 = arith.constant 0 : i32
    return %c0_i32, %c0_i32_0 : i32, i32
  }
  func.func @transform_10(%arg0: i32) -> (i32, i32) {
    %c0_i32 = arith.constant 0 : i32
    %c0_i32_0 = arith.constant 0 : i32
    %c0_i32_1 = arith.constant 0 : i32
    return %c0_i32, %c0_i32_0 : i32, i32
  }
  func.func @transform_11(%arg0: i32) -> (i32, i32) {
    %c0_i32 = arith.constant 0 : i32
    %c0_i32_0 = arith.constant 0 : i32
    return %c0_i32, %arg0 : i32, i32
  }
}

</mosaic_0001>

<llo_original>
// kernel: tpu_custom_call.1
$region0: #{tpu_custom_call.1}
  #allocation0 [shape = 'u32[]', space=smem, size = 0x4, offset = 0x4, fixed_abs, tag = 'smem constant byte address 0x4 - core index']
  #allocation1 [shape = 'u32[144,128]{1,0:T(1,128)}', space=vmem, size = 0x12000, scoped, tag = 'internal scratch']
  %s0 = inlined_call_operand.vmem [shape: f32[128,8], index: 0, kind: input, shape index: {}]
  %s1 = inlined_call_operand.vmem [shape: f32[8,8], index: 1, kind: input, shape index: {}]
  %s2 = inlined_call_operand.vmem [shape: f32[8,1], index: 2, kind: input, shape index: {}]
  %s3 = inlined_call_operand.vmem [shape: f32[16,8], index: 3, kind: input, shape index: {}]
  %s4 = inlined_call_operand.vmem [shape: f32[16,1], index: 4, kind: input, shape index: {}]
  %s5 = inlined_call_operand.vmem [shape: f32[16,16], index: 5, kind: input, shape index: {}]
  %s6 = inlined_call_operand.vmem [shape: f32[16,1], index: 6, kind: input, shape index: {}]
  %s7 = inlined_call_operand.vmem [shape: f32[16,16], index: 7, kind: input, shape index: {}]
  %s8 = inlined_call_operand.vmem [shape: f32[16,1], index: 8, kind: input, shape index: {}]
  %s9 = inlined_call_operand.vmem [shape: f32[8,16], index: 9, kind: input, shape index: {}]
  %s10 = inlined_call_operand.vmem [shape: f32[8,1], index: 10, kind: input, shape index: {}]
  %s11 = inlined_call_operand.hbm [shape: f32[1,128], index: 11, kind: output, shape index: {}]
  %s12 = sld [smem:[#allocation0]]
  $region54: #{tpu_custom_call.1} parent=0
    _
  %s14 = ssub.s32 1, %s12
  %s15 = scalar_select 0, %s14, %s12
  $region1: #{tpu_custom_call.1} parent=0
    #allocation2 [shape = 'u8[512]{0}', space=vmem, size = 0x400, scoped, tag = 'output window, operand 0, single buffered']
    #allocation3 [shape = 's32[1]{0}', space=sflag, size = 0x4, scoped, tag = 'scoped memory for tpu_custom_call.1']
    %16 = vsyncpa [#allocation3], 0
    // Predicated region
    $region2: #{tpu_custom_call.1} parent=1 // pred_check
      _
    $region3: #{tpu_custom_call.1} parent=1 // pred_check_branch
      %18 = sbr.rel (0) target = $region5
    $region4: #{tpu_custom_call.1} parent=1 // pred_region
      _
    $region5: #{tpu_custom_call.1} parent=1 // pred_fallthru
      _
    // Predicated region
    $region6: #{tpu_custom_call.1} parent=1 // pred_check
      _
    $region7: #{tpu_custom_call.1} parent=1 // pred_check_branch
      %20 = sbr.rel (0) target = $region9
    $region8: #{tpu_custom_call.1} parent=1 // pred_region
      _
    $region9: #{tpu_custom_call.1} parent=1 // pred_fallthru
      _
    // Predicated region
    $region10: #{tpu_custom_call.1} parent=1 // pred_check
      _
    $region11: #{tpu_custom_call.1} parent=1 // pred_check_branch
      %22 = sbr.rel (0) target = $region13
    $region12: #{tpu_custom_call.1} parent=1 // pred_region
      _
    $region13: #{tpu_custom_call.1} parent=1 // pred_fallthru
      _
    // Predicated region
    $region14: #{tpu_custom_call.1} parent=1 // pred_check
      _
    $region15: #{tpu_custom_call.1} parent=1 // pred_check_branch
      %24 = sbr.rel (0) target = $region17
    $region16: #{tpu_custom_call.1} parent=1 // pred_region
      _
    $region17: #{tpu_custom_call.1} parent=1 // pred_fallthru
      _
    // Predicated region
    $region18: #{tpu_custom_call.1} parent=1 // pred_check
      _
    $region19: #{tpu_custom_call.1} parent=1 // pred_check_branch
      %26 = sbr.rel (0) target = $region21
    $region20: #{tpu_custom_call.1} parent=1 // pred_region
      _
    $region21: #{tpu_custom_call.1} parent=1 // pred_fallthru
      _
    // Predicated region
    $region22: #{tpu_custom_call.1} parent=1 // pred_check
      _
    $region23: #{tpu_custom_call.1} parent=1 // pred_check_branch
      %28 = sbr.rel (0) target = $region25
    $region24: #{tpu_custom_call.1} parent=1 // pred_region
      _
    $region25: #{tpu_custom_call.1} parent=1 // pred_fallthru
      _
    // Predicated region
    $region26: #{tpu_custom_call.1} parent=1 // pred_check
      _
    $region27: #{tpu_custom_call.1} parent=1 // pred_check_branch
      %30 = sbr.rel (0) target = $region29
    $region28: #{tpu_custom_call.1} parent=1 // pred_region
      _
    $region29: #{tpu_custom_call.1} parent=1 // pred_fallthru
      _
    // Predicated region
    $region30: #{tpu_custom_call.1} parent=1 // pred_check
      _
    $region31: #{tpu_custom_call.1} parent=1 // pred_check_branch
      %32 = sbr.rel (0) target = $region33
    $region32: #{tpu_custom_call.1} parent=1 // pred_region
      _
    $region33: #{tpu_custom_call.1} parent=1 // pred_fallthru
      _
    // Predicated region
    $region34: #{tpu_custom_call.1} parent=1 // pred_check
      _
    $region35: #{tpu_custom_call.1} parent=1 // pred_check_branch
      %34 = sbr.rel (0) target = $region37
    $region36: #{tpu_custom_call.1} parent=1 // pred_region
      _
    $region37: #{tpu_custom_call.1} parent=1 // pred_fallthru
      _
    // Predicated region
    $region38: #{tpu_custom_call.1} parent=1 // pred_check
      _
    $region39: #{tpu_custom_call.1} parent=1 // pred_check_branch
      %36 = sbr.rel (0) target = $region41
    $region40: #{tpu_custom_call.1} parent=1 // pred_region
      _
    $region41: #{tpu_custom_call.1} parent=1 // pred_fallthru
      _
    // Predicated region
    $region42: #{tpu_custom_call.1} parent=1 // pred_check
      _
    $region43: #{tpu_custom_call.1} parent=1 // pred_check_branch
      %38 = sbr.rel (0) target = $region45
    $region44: #{tpu_custom_call.1} parent=1 // pred_region
      _
    $region45: #{tpu_custom_call.1} parent=1 // pred_fallthru
      _
    %v39 = vld [vmem:[%s1] sm:$0xff]
    %v40 = vld [vmem:[%s0] sm:$0xff]
    %v41 = vld [vmem:[%s0 + $0x8] sm:$0xff]
    %v42 = vld [vmem:[%s0 + $0x10] sm:$0xff]
    %v43 = vld [vmem:[%s0 + $0x18] sm:$0xff]
    %v44 = vld [vmem:[%s0 + $0x20] sm:$0xff]
    %v45 = vld [vmem:[%s0 + $0x28] sm:$0xff]
    %v46 = vld [vmem:[%s0 + $0x30] sm:$0xff]
    %v47 = vld [vmem:[%s0 + $0x38] sm:$0xff]
    %v48 = vld [vmem:[%s0 + $0x40] sm:$0xff]
    %v49 = vld [vmem:[%s0 + $0x48] sm:$0xff]
    %v50 = vld [vmem:[%s0 + $0x50] sm:$0xff]
    %v51 = vld [vmem:[%s0 + $0x58] sm:$0xff]
    %v52 = vld [vmem:[%s0 + $0x60] sm:$0xff]
    %v53 = vld [vmem:[%s0 + $0x68] sm:$0xff]
    %v54 = vld [vmem:[%s0 + $0x70] sm:$0xff]
    %v55 = vld [vmem:[%s0 + $0x78] sm:$0xff]
    %v56 = vld [vmem:[%s2] sm:$0xff]
    %58 = vset.pattern.permute.xlu0 0
    %59 = vperm.xlu0 %58, %v56
    %v60 = vpop.permute.xlu0 %59
    %vm62 = vcmask 64512
    %v64 = vsel %vm62, %v39, 0
    %v67 = vsel %vm62, %v40, 0
    %v70 = vsel %vm62, %v41, 0
    %v73 = vsel %vm62, %v42, 0
    %v76 = vsel %vm62, %v43, 0
    %v79 = vsel %vm62, %v44, 0
    %v82 = vsel %vm62, %v45, 0
    %v85 = vsel %vm62, %v46, 0
    %v88 = vsel %vm62, %v47, 0
    %v91 = vsel %vm62, %v48, 0
    %v94 = vsel %vm62, %v49, 0
    %v97 = vsel %vm62, %v50, 0
    %v100 = vsel %vm62, %v51, 0
    %v103 = vsel %vm62, %v52, 0
    %v106 = vsel %vm62, %v53, 0
    %v109 = vsel %vm62, %v54, 0
    %v112 = vsel %vm62, %v55, 0
    %114 = vmatprep.subr.mxu0 0.0
    %115 = vmatpush1.xpose.msra.mxu0 %v67
    %116 = vmatprep.subr.mxu0 0.0
    %117 = vmatpush1.xpose.msra.mxu0 %v70
    %118 = vmatprep.subr.mxu0 0.0
    %119 = vmatpush1.xpose.msra.mxu0 %v73
    %120 = vmatprep.subr.mxu0 0.0
    %121 = vmatpush1.xpose.msra.mxu0 %v76
    %122 = vmatprep.subr.mxu0 0.0
    %123 = vmatpush1.xpose.msra.mxu0 %v79
    %124 = vmatprep.subr.mxu0 0.0
    %125 = vmatpush1.xpose.msra.mxu0 %v82
    %126 = vmatprep.subr.mxu0 0.0
    %127 = vmatpush1.xpose.msra.mxu0 %v85
    %128 = vmatprep.subr.mxu0 0.0
    %129 = vmatpush1.xpose.msra.mxu0 %v88
    %130 = vmatprep.subr.mxu0 0.0
    %131 = vmatpush1.xpose.msra.mxu0 %v91
    %132 = vmatprep.subr.mxu0 0.0
    %133 = vmatpush1.xpose.msra.mxu0 %v94
    %134 = vmatprep.subr.mxu0 0.0
    %135 = vmatpush1.xpose.msra.mxu0 %v97
    %136 = vmatprep.subr.mxu0 0.0
    %137 = vmatpush1.xpose.msra.mxu0 %v100
    %138 = vmatprep.subr.mxu0 0.0
    %139 = vmatpush1.xpose.msra.mxu0 %v103
    %140 = vmatprep.subr.mxu0 0.0
    %141 = vmatpush1.xpose.msra.mxu0 %v106
    %142 = vmatprep.subr.mxu0 0.0
    %143 = vmatpush1.xpose.msra.mxu0 %v109
    %144 = vmatprep.subr.mxu0 0.0
    %145 = vmatpush1.xpose.msra.mxu0 %v112
    %146 = vmatprep.subr.mxu0 0.0
    %147 = vmatpush1.xpose.msra.mxu0 0.0
    %148 = vmatprep.subr.mxu0 0.0
    %149 = vmatpush1.xpose.msra.mxu0 0.0
    %150 = vmatprep.subr.mxu0 0.0
    %151 = vmatpush1.xpose.msra.mxu0 0.0
    %152 = vmatprep.subr.mxu0 0.0
    %153 = vmatpush1.xpose.msra.mxu0 0.0
    %154 = vmatprep.subr.mxu0 0.0
    %155 = vmatpush1.xpose.msra.mxu0 0.0
    %156 = vmatprep.subr.mxu0 0.0
    %157 = vmatpush1.xpose.msra.mxu0 0.0
    %158 = vmatprep.subr.mxu0 0.0
    %159 = vmatpush1.xpose.msra.mxu0 0.0
    %160 = vmatprep.subr.mxu0 0.0
    %161 = vmatpush1.xpose.msra.mxu0 0.0
    %162 = vmatprep.subr.mxu0 0.0
    %163 = vmatpush1.xpose.msra.mxu0 0.0
    %164 = vmatprep.subr.mxu0 0.0
    %165 = vmatpush1.xpose.msra.mxu0 0.0
    %166 = vmatprep.subr.mxu0 0.0
    %167 = vmatpush1.xpose.msra.mxu0 0.0
    %168 = vmatprep.subr.mxu0 0.0
    %169 = vmatpush1.xpose.msra.mxu0 0.0
    %170 = vmatprep.subr.mxu0 0.0
    %171 = vmatpush1.xpose.msra.mxu0 0.0
    %172 = vmatprep.subr.mxu0 0.0
    %173 = vmatpush1.xpose.msra.mxu0 0.0
    %174 = vmatprep.subr.mxu0 0.0
    %175 = vmatpush1.xpose.msra.mxu0 0.0
    %176 = vmatprep.subr.mxu0 0.0
    %177 = vmatpush1.xpose.msra.mxu0 0.0
    %178 = vmatprep.mubr.f32.mxu0 0.0
    %179 = vmatmul.mubr.f32.gmra.mrb[0].mxu0 %v64
    %v180 = vpop.f32.mrb[0].mxu0
    %v181 = vadd.f32 %v60, %v180
    %v182 = vpop.f32.mrb[0].mxu0
    %183 = vdwg.mxu0
    %v184 = vmax.f32 %v181, 0.0
    %v185 = vld [vmem:[%s3] sm:$0xff]
    %v186 = vld [vmem:[%s3 + $0x8] sm:$0xff]
    %v187 = vld [vmem:[%s4] sm:$0xff]
    %v188 = vld [vmem:[%s4 + $0x8] sm:$0xff]
    %190 = vset.pattern.permute.xlu0 0
    %191 = vperm.xlu0 %190, %v187
    %v192 = vpop.permute.xlu0 %191
    %195 = vset.pattern.permute.xlu0 0
    %196 = vperm.xlu0 %195, %v188
    %v197 = vpop.permute.xlu0 %196
    %v200 = vsel %vm62, %v185, 0
    %v203 = vsel %vm62, %v186, 0
    %205 = vmatprep.subr.mxu0 0.0
    %206 = vmatpush1.msra.mxu0 %v184
    %207 = vmatprep.subr.mxu0 0.0
    %208 = vmatpush1.msra.mxu0 0.0
    %209 = vmatprep.subr.mxu0 0.0
    %210 = vmatpush1.msra.mxu0 0.0
    %211 = vmatprep.subr.mxu0 0.0
    %212 = vmatpush1.msra.mxu0 0.0
    %213 = vmatprep.subr.mxu0 0.0
    %214 = vmatpush1.msra.mxu0 0.0
    %215 = vmatprep.subr.mxu0 0.0
    %216 = vmatpush1.msra.mxu0 0.0
    %217 = vmatprep.subr.mxu0 0.0
    %218 = vmatpush1.msra.mxu0 0.0
    %219 = vmatprep.subr.mxu0 0.0
    %220 = vmatpush1.msra.mxu0 0.0
    %221 = vmatprep.subr.mxu0 0.0
    %222 = vmatpush1.msra.mxu0 0.0
    %223 = vmatprep.subr.mxu0 0.0
    %224 = vmatpush1.msra.mxu0 0.0
    %225 = vmatprep.subr.mxu0 0.0
    %226 = vmatpush1.msra.mxu0 0.0
    %227 = vmatprep.subr.mxu0 0.0
    %228 = vmatpush1.msra.mxu0 0.0
    %229 = vmatprep.subr.mxu0 0.0
    %230 = vmatpush1.msra.mxu0 0.0
    %231 = vmatprep.subr.mxu0 0.0
    %232 = vmatpush1.msra.mxu0 0.0
    %233 = vmatprep.subr.mxu0 0.0
    %234 = vmatpush1.msra.mxu0 0.0
    %235 = vmatprep.subr.mxu0 0.0
    %236 = vmatpush1.msra.mxu0 0.0
    %237 = vmatprep.subr.mxu0 0.0
    %238 = vmatpush1.msra.mxu0 0.0
    %239 = vmatprep.subr.mxu0 0.0
    %240 = vmatpush1.msra.mxu0 0.0
    %241 = vmatprep.subr.mxu0 0.0
    %242 = vmatpush1.msra.mxu0 0.0
    %243 = vmatprep.subr.mxu0 0.0
    %244 = vmatpush1.msra.mxu0 0.0
    %245 = vmatprep.subr.mxu0 0.0
    %246 = vmatpush1.msra.mxu0 0.0
    %247 = vmatprep.subr.mxu0 0.0
    %248 = vmatpush1.msra.mxu0 0.0
    %249 = vmatprep.subr.mxu0 0.0
    %250 = vmatpush1.msra.mxu0 0.0
    %251 = vmatprep.subr.mxu0 0.0
    %252 = vmatpush1.msra.mxu0 0.0
    %253 = vmatprep.subr.mxu0 0.0
    %254 = vmatpush1.msra.mxu0 0.0
    %255 = vmatprep.subr.mxu0 0.0
    %256 = vmatpush1.msra.mxu0 0.0
    %257 = vmatprep.subr.mxu0 0.0
    %258 = vmatpush1.msra.mxu0 0.0
    %259 = vmatprep.subr.mxu0 0.0
    %260 = vmatpush1.msra.mxu0 0.0
    %261 = vmatprep.subr.mxu0 0.0
    %262 = vmatpush1.msra.mxu0 0.0
    %263 = vmatprep.subr.mxu0 0.0
    %264 = vmatpush1.msra.mxu0 0.0
    %265 = vmatprep.subr.mxu0 0.0
    %266 = vmatpush1.msra.mxu0 0.0
    %267 = vmatprep.subr.mxu0 0.0
    %268 = vmatpush1.msra.mxu0 0.0
    %269 = vmatprep.mubr.f32.mxu0 0.0
    %270 = vmatmul.mubr.f32.gmra.mrb[0].mxu0 %v200
    %v271 = vpop.f32.mrb[0].mxu0
    %v272 = vadd.f32 %v192, %v271
    %v273 = vpop.f32.mrb[0].mxu0
    %274 = vmatprep.mubr.f32.mxu0 0.0
    %275 = vmatmul.mubr.f32.gmra.mrb[0].mxu0 %v203
    %v276 = vpop.f32.mrb[0].mxu0
    %v277 = vadd.f32 %v197, %v276
    %v278 = vpop.f32.mrb[0].mxu0
    %279 = vdwg.mxu0
    %v280 = vmax.f32 %v272, 0.0
    %v281 = vmax.f32 %v277, 0.0
    %v282 = vld [vmem:[%s5] sm:$0xff]
    %v283 = vld [vmem:[%s5 + $0x8] sm:$0xff]
    %v284 = vld [vmem:[%s6] sm:$0xff]
    %v285 = vld [vmem:[%s6 + $0x8] sm:$0xff]
    %287 = vset.pattern.permute.xlu0 0
    %288 = vperm.xlu0 %287, %v284
    %v289 = vpop.permute.xlu0 %288
    %292 = vset.pattern.permute.xlu0 0
    %293 = vperm.xlu0 %292, %v285
    %v294 = vpop.permute.xlu0 %293
    %vm296 = vcmask 130048
    %v298 = vsel %vm296, %v282, 0
    %v301 = vsel %vm296, %v283, 0
    %303 = vmatprep.subr.mxu0 0.0
    %304 = vmatpush1.msra.mxu0 %v280
    %305 = vmatprep.subr.mxu0 0.0
    %306 = vmatpush1.msra.mxu0 %v281
    %307 = vmatprep.subr.mxu0 0.0
    %308 = vmatpush1.msra.mxu0 0.0
    %309 = vmatprep.subr.mxu0 0.0
    %310 = vmatpush1.msra.mxu0 0.0
    %311 = vmatprep.subr.mxu0 0.0
    %312 = vmatpush1.msra.mxu0 0.0
    %313 = vmatprep.subr.mxu0 0.0
    %314 = vmatpush1.msra.mxu0 0.0
    %315 = vmatprep.subr.mxu0 0.0
    %316 = vmatpush1.msra.mxu0 0.0
    %317 = vmatprep.subr.mxu0 0.0
    %318 = vmatpush1.msra.mxu0 0.0
    %319 = vmatprep.subr.mxu0 0.0
    %320 = vmatpush1.msra.mxu0 0.0
    %321 = vmatprep.subr.mxu0 0.0
    %322 = vmatpush1.msra.mxu0 0.0
    %323 = vmatprep.subr.mxu0 0.0
    %324 = vmatpush1.msra.mxu0 0.0
    %325 = vmatprep.subr.mxu0 0.0
    %326 = vmatpush1.msra.mxu0 0.0
    %327 = vmatprep.subr.mxu0 0.0
    %328 = vmatpush1.msra.mxu0 0.0
    %329 = vmatprep.subr.mxu0 0.0
    %330 = vmatpush1.msra.mxu0 0.0
    %331 = vmatprep.subr.mxu0 0.0
    %332 = vmatpush1.msra.mxu0 0.0
    %333 = vmatprep.subr.mxu0 0.0
    %334 = vmatpush1.msra.mxu0 0.0
    %335 = vmatprep.subr.mxu0 0.0
    %336 = vmatpush1.msra.mxu0 0.0
    %337 = vmatprep.subr.mxu0 0.0
    %338 = vmatpush1.msra.mxu0 0.0
    %339 = vmatprep.subr.mxu0 0.0
    %340 = vmatpush1.msra.mxu0 0.0
    %341 = vmatprep.subr.mxu0 0.0
    %342 = vmatpush1.msra.mxu0 0.0
    %343 = vmatprep.subr.mxu0 0.0
    %344 = vmatpush1.msra.mxu0 0.0
    %345 = vmatprep.subr.mxu0 0.0
    %346 = vmatpush1.msra.mxu0 0.0
    %347 = vmatprep.subr.mxu0 0.0
    %348 = vmatpush1.msra.mxu0 0.0
    %349 = vmatprep.subr.mxu0 0.0
    %350 = vmatpush1.msra.mxu0 0.0
    %351 = vmatprep.subr.mxu0 0.0
    %352 = vmatpush1.msra.mxu0 0.0
    %353 = vmatprep.subr.mxu0 0.0
    %354 = vmatpush1.msra.mxu0 0.0
    %355 = vmatprep.subr.mxu0 0.0
    %356 = vmatpush1.msra.mxu0 0.0
    %357 = vmatprep.subr.mxu0 0.0
    %358 = vmatpush1.msra.mxu0 0.0
    %359 = vmatprep.subr.mxu0 0.0
    %360 = vmatpush1.msra.mxu0 0.0
    %361 = vmatprep.subr.mxu0 0.0
    %362 = vmatpush1.msra.mxu0 0.0
    %363 = vmatprep.subr.mxu0 0.0
    %364 = vmatpush1.msra.mxu0 0.0
    %365 = vmatprep.subr.mxu0 0.0
    %366 = vmatpush1.msra.mxu0 0.0
    %367 = vmatprep.mubr.f32.mxu0 0.0
    %368 = vmatmul.mubr.f32.gmra.mrb[0].mxu0 %v298
    %v369 = vpop.f32.mrb[0].mxu0
    %v370 = vadd.f32 %v289, %v369
    %v371 = vpop.f32.mrb[0].mxu0
    %372 = vmatprep.mubr.f32.mxu0 0.0
    %373 = vmatmul.mubr.f32.gmra.mrb[0].mxu0 %v301
    %v374 = vpop.f32.mrb[0].mxu0
    %v375 = vadd.f32 %v294, %v374
    %v376 = vpop.f32.mrb[0].mxu0
    %377 = vdwg.mxu0
    %v378 = vmax.f32 %v370, 0.0
    %v379 = vmax.f32 %v375, 0.0
    %v380 = vld [vmem:[%s7] sm:$0xff]
    %v381 = vld [vmem:[%s7 + $0x8] sm:$0xff]
    %v382 = vld [vmem:[%s8] sm:$0xff]
    %v383 = vld [vmem:[%s8 + $0x8] sm:$0xff]
    %385 = vset.pattern.permute.xlu0 0
    %386 = vperm.xlu0 %385, %v382
    %v387 = vpop.permute.xlu0 %386
    %390 = vset.pattern.permute.xlu0 0
    %391 = vperm.xlu0 %390, %v383
    %v392 = vpop.permute.xlu0 %391
    %v395 = vsel %vm296, %v380, 0
    %v398 = vsel %vm296, %v381, 0
    %400 = vmatprep.subr.mxu0 0.0
    %401 = vmatpush1.msra.mxu0 %v378
    %402 = vmatprep.subr.mxu0 0.0
    %403 = vmatpush1.msra.mxu0 %v379
    %404 = vmatprep.subr.mxu0 0.0
    %405 = vmatpush1.msra.mxu0 0.0
    %406 = vmatprep.subr.mxu0 0.0
    %407 = vmatpush1.msra.mxu0 0.0
    %408 = vmatprep.subr.mxu0 0.0
    %409 = vmatpush1.msra.mxu0 0.0
    %410 = vmatprep.subr.mxu0 0.0
    %411 = vmatpush1.msra.mxu0 0.0
    %412 = vmatprep.subr.mxu0 0.0
    %413 = vmatpush1.msra.mxu0 0.0
    %414 = vmatprep.subr.mxu0 0.0
    %415 = vmatpush1.msra.mxu0 0.0
    %416 = vmatprep.subr.mxu0 0.0
    %417 = vmatpush1.msra.mxu0 0.0
    %418 = vmatprep.subr.mxu0 0.0
    %419 = vmatpush1.msra.mxu0 0.0
    %420 = vmatprep.subr.mxu0 0.0
    %421 = vmatpush1.msra.mxu0 0.0
    %422 = vmatprep.subr.mxu0 0.0
    %423 = vmatpush1.msra.mxu0 0.0
    %424 = vmatprep.subr.mxu0 0.0
    %425 = vmatpush1.msra.mxu0 0.0
    %426 = vmatprep.subr.mxu0 0.0
    %427 = vmatpush1.msra.mxu0 0.0
    %428 = vmatprep.subr.mxu0 0.0
    %429 = vmatpush1.msra.mxu0 0.0
    %430 = vmatprep.subr.mxu0 0.0
    %431 = vmatpush1.msra.mxu0 0.0
    %432 = vmatprep.subr.mxu0 0.0
    %433 = vmatpush1.msra.mxu0 0.0
    %434 = vmatprep.subr.mxu0 0.0
    %435 = vmatpush1.msra.mxu0 0.0
    %436 = vmatprep.subr.mxu0 0.0
    %437 = vmatpush1.msra.mxu0 0.0
    %438 = vmatprep.subr.mxu0 0.0
    %439 = vmatpush1.msra.mxu0 0.0
    %440 = vmatprep.subr.mxu0 0.0
    %441 = vmatpush1.msra.mxu0 0.0
    %442 = vmatprep.subr.mxu0 0.0
    %443 = vmatpush1.msra.mxu0 0.0
    %444 = vmatprep.subr.mxu0 0.0
    %445 = vmatpush1.msra.mxu0 0.0
    %446 = vmatprep.subr.mxu0 0.0
    %447 = vmatpush1.msra.mxu0 0.0
    %448 = vmatprep.subr.mxu0 0.0
    %449 = vmatpush1.msra.mxu0 0.0
    %450 = vmatprep.subr.mxu0 0.0
    %451 = vmatpush1.msra.mxu0 0.0
    %452 = vmatprep.subr.mxu0 0.0
    %453 = vmatpush1.msra.mxu0 0.0
    %454 = vmatprep.subr.mxu0 0.0
    %455 = vmatpush1.msra.mxu0 0.0
    %456 = vmatprep.subr.mxu0 0.0
    %457 = vmatpush1.msra.mxu0 0.0
    %458 = vmatprep.subr.mxu0 0.0
    %459 = vmatpush1.msra.mxu0 0.0
    %460 = vmatprep.subr.mxu0 0.0
    %461 = vmatpush1.msra.mxu0 0.0
    %462 = vmatprep.subr.mxu0 0.0
    %463 = vmatpush1.msra.mxu0 0.0
    %464 = vmatprep.mubr.f32.mxu0 0.0
    %465 = vmatmul.mubr.f32.gmra.mrb[0].mxu0 %v395
    %v466 = vpop.f32.mrb[0].mxu0
    %v467 = vadd.f32 %v387, %v466
    %v468 = vpop.f32.mrb[0].mxu0
    %469 = vmatprep.mubr.f32.mxu0 0.0
    %470 = vmatmul.mubr.f32.gmra.mrb[0].mxu0 %v398
    %v471 = vpop.f32.mrb[0].mxu0
    %v472 = vadd.f32 %v392, %v471
    %v473 = vpop.f32.mrb[0].mxu0
    %474 = vdwg.mxu0
    %v475 = vmax.f32 %v467, 0.0
    %v476 = vmax.f32 %v472, 0.0
    %v477 = vld [vmem:[%s9] sm:$0xff]
    %v478 = vld [vmem:[%s10] sm:$0xff]
    %480 = vset.pattern.permute.xlu0 0
    %481 = vperm.xlu0 %480, %v478
    %v482 = vpop.permute.xlu0 %481
    %v485 = vsel %vm296, %v477, 0
    %487 = vmatprep.subr.mxu0 0.0
    %488 = vmatpush1.msra.mxu0 %v475
    %489 = vmatprep.subr.mxu0 0.0
    %490 = vmatpush1.msra.mxu0 %v476
    %491 = vmatprep.subr.mxu0 0.0
    %492 = vmatpush1.msra.mxu0 0.0
    %493 = vmatprep.subr.mxu0 0.0
    %494 = vmatpush1.msra.mxu0 0.0
    %495 = vmatprep.subr.mxu0 0.0
    %496 = vmatpush1.msra.mxu0 0.0
    %497 = vmatprep.subr.mxu0 0.0
    %498 = vmatpush1.msra.mxu0 0.0
    %499 = vmatprep.subr.mxu0 0.0
    %500 = vmatpush1.msra.mxu0 0.0
    %501 = vmatprep.subr.mxu0 0.0
    %502 = vmatpush1.msra.mxu0 0.0
    %503 = vmatprep.subr.mxu0 0.0
    %504 = vmatpush1.msra.mxu0 0.0
    %505 = vmatprep.subr.mxu0 0.0
    %506 = vmatpush1.msra.mxu0 0.0
    %507 = vmatprep.subr.mxu0 0.0
    %508 = vmatpush1.msra.mxu0 0.0
    %509 = vmatprep.subr.mxu0 0.0
    %510 = vmatpush1.msra.mxu0 0.0
    %511 = vmatprep.subr.mxu0 0.0
    %512 = vmatpush1.msra.mxu0 0.0
    %513 = vmatprep.subr.mxu0 0.0
    %514 = vmatpush1.msra.mxu0 0.0
    %515 = vmatprep.subr.mxu0 0.0
    %516 = vmatpush1.msra.mxu0 0.0
    %517 = vmatprep.subr.mxu0 0.0
    %518 = vmatpush1.msra.mxu0 0.0
    %519 = vmatprep.subr.mxu0 0.0
    %520 = vmatpush1.msra.mxu0 0.0
    %521 = vmatprep.subr.mxu0 0.0
    %522 = vmatpush1.msra.mxu0 0.0
    %523 = vmatprep.subr.mxu0 0.0
    %524 = vmatpush1.msra.mxu0 0.0
    %525 = vmatprep.subr.mxu0 0.0
    %526 = vmatpush1.msra.mxu0 0.0
    %527 = vmatprep.subr.mxu0 0.0
    %528 = vmatpush1.msra.mxu0 0.0
    %529 = vmatprep.subr.mxu0 0.0
    %530 = vmatpush1.msra.mxu0 0.0
    %531 = vmatprep.subr.mxu0 0.0
    %532 = vmatpush1.msra.mxu0 0.0
    %533 = vmatprep.subr.mxu0 0.0
    %534 = vmatpush1.msra.mxu0 0.0
    %535 = vmatprep.subr.mxu0 0.0
    %536 = vmatpush1.msra.mxu0 0.0
    %537 = vmatprep.subr.mxu0 0.0
    %538 = vmatpush1.msra.mxu0 0.0
    %539 = vmatprep.subr.mxu0 0.0
    %540 = vmatpush1.msra.mxu0 0.0
    %541 = vmatprep.subr.mxu0 0.0
    %542 = vmatpush1.msra.mxu0 0.0
    %543 = vmatprep.subr.mxu0 0.0
    %544 = vmatpush1.msra.mxu0 0.0
    %545 = vmatprep.subr.mxu0 0.0
    %546 = vmatpush1.msra.mxu0 0.0
    %547 = vmatprep.subr.mxu0 0.0
    %548 = vmatpush1.msra.mxu0 0.0
    %549 = vmatprep.subr.mxu0 0.0
    %550 = vmatpush1.msra.mxu0 0.0
    %551 = vmatprep.mubr.f32.mxu0 0.0
    %552 = vmatmul.mubr.f32.gmra.mrb[0].mxu0 %v485
    %v553 = vpop.f32.mrb[0].mxu0
    %v554 = vadd.f32 %v482, %v553
    %v555 = vpop.f32.mrb[0].mxu0
    %556 = vdwg.mxu0
    %v557 = vsub.f32 0.0, %v554
    %v558 = vmul.f32 %v557, 1.442695
    %v559 = vpow.pop %v558
    %v560 = vadd.f32 %v559, 1.0
    %v561 = vrcp.pop %v560
    %v562 = vmul.f32 1.0, %v561
    %563 = vst [vmem:[#allocation2] sm:$0x1] %v562
    // Predicated region
    $region46: #{tpu_custom_call.1} parent=1 // pred_check
      _
    $region47: #{tpu_custom_call.1} parent=1 // pred_check_branch
      %565 = sbr.rel (0) target = $region49
    $region48: #{tpu_custom_call.1} parent=1 // pred_region
      %s567 = ssub.s32 16, 16
      %568 = vsyncadd [#allocation3], %s567
      %s570 = sshll.u32 [#allocation2], 4
      %s571 = int_to_ptr.vmem [resolvable:$true] %s570
      %573 = dma.vmem_to_hbm [thread:$0]  %s571, 16, %s11, [#allocation3]
    $region49: #{tpu_custom_call.1} parent=1 // pred_fallthru
      _
    // Predicated region
    $region50: #{tpu_custom_call.1} parent=1 // pred_check
      _
    $region51: #{tpu_custom_call.1} parent=1 // pred_check_branch
      %575 = sbr.rel (0) target = $region53
    $region52: #{tpu_custom_call.1} parent=1 // pred_region
      %576 = dma.done [#allocation3], 16
    $region53: #{tpu_custom_call.1} parent=1 // pred_fallthru
      _
    %577 = vsyncpa [#allocation3], 1

</llo_original>
